<compile_context>
chip_gen: v6e
topology: v6e:2x2x1
jax: 0.10.0
libtpu: 0.0.40
codegen_flags: <defaults>
</compile_context>

<pallas_src>
import functools

import jax
import jax.numpy as jnp
from jax.experimental import pallas as pl
from jax.experimental.pallas import tpu as pltpu

IN_DIM = 784
NODES = 100          # default `nodes` in the PyTorch module
LANE = 128
SUBLANE = 8


def _round_up(x, m):
    return (x + m - 1) // m * m


def autoenc_kernel(x_ref, w0_ref, b0_ref, w1_ref, b1_ref, o_ref):
    # Cast x to bf16 on the VPU (free — kernel is HBM-bound, not VALU-bound)
    # so the MXU gets bf16 inputs while x is DMA'd HBM->VMEM exactly once.
    xb = x_ref[...].astype(jnp.bfloat16)
    # Layer 0: (TB, 784)bf16 @ (784, 128)bf16 -> f32 acc, + b0 (f32)
    h = jnp.dot(xb, w0_ref[...],
                preferred_element_type=jnp.float32) + b0_ref[...]
    # Sigmoid in f32 (EUP exp; supported on all generations incl. v5e)
    h = jax.nn.sigmoid(h)
    # Layer 1: (TB, 128)bf16 @ (128, 784)bf16 -> f32 acc, + b1 (f32)
    y = jnp.dot(h.astype(jnp.bfloat16), w1_ref[...],
                preferred_element_type=jnp.float32) + b1_ref[...]
    o_ref[...] = y.astype(o_ref.dtype)


def prepare_params(w0, b0, w1, b1):
    """One-time parameter prep, hoisted out of the per-call forward.

    Pads the hidden dim (100 -> 128) so hidden activations are lane-dense,
    casts weights to bf16 for the MXU, keeps biases in f32.  Zero rows in the
    padded W1 exactly cancel the sigmoid(0)=0.5 contribution of pad lanes.
    Weights stored as (in, out) so the kernel computes x @ W.
    """
    nodes = w0.shape[1]
    nodes_pad = _round_up(nodes, LANE)
    w0p = jnp.pad(w0, ((0, 0), (0, nodes_pad - nodes))).astype(jnp.bfloat16)
    b0p = jnp.pad(b0.reshape(1, -1).astype(jnp.float32),
                  ((0, 0), (0, nodes_pad - nodes)))
    w1p = jnp.pad(w1, ((0, nodes_pad - nodes), (0, 0))).astype(jnp.bfloat16)
    b1p = b1.reshape(1, -1).astype(jnp.float32)
    return w0p, b0p, w1p, b1p


@functools.partial(jax.jit, static_argnames=("tb",))
def autoenc_forward(x, w0p, b0p, w1p, b1p, *, tb=1024):
    """Forward pass of the autoencoder.

    x:   (B, 784) f32
    w0p: (784, nodes_pad) bf16, b0p: (1, nodes_pad) f32
    w1p: (nodes_pad, 784) bf16, b1p: (1, 784) f32
    Returns (B, 784) f32.
    """
    B, in_dim = x.shape
    nodes_pad = w0p.shape[1]

    # Batch tile: large enough to amortize ~0.35 us/step pipeline overhead,
    # but split so we get >= 2 grid steps (keeps v7x's second TC busy for
    # small batches); multiple of 8 for sublane alignment.
    TB = max(SUBLANE, min(tb, _round_up(pl.cdiv(B, 2), SUBLANE)))
    grid = (pl.cdiv(B, TB),)   # ragged last block: Pallas masks OOB writes

    cost = pl.CostEstimate(
        flops=4 * B * in_dim * nodes_pad,          # two matmuls
        transcendentals=B * nodes_pad,             # exp in sigmoid
        bytes_accessed=(x.size * 4 + w0p.size * 2 + w1p.size * 2
                        + b0p.size * 4 + b1p.size * 4 + B * in_dim * 4),
    )

    # Double-buffered VMEM footprint: x (f32) + out (f32) tiles + weights.
    vmem_est = (2 * TB * in_dim * 4 + 2 * TB * in_dim * 4
                + 2 * (w0p.size * 2 + w1p.size * 2
                       + b0p.size * 4 + b1p.size * 4))
    # Only raise the scoped-VMEM limit when the tile actually needs it; stay
    # comfortably under v7x's 64 MiB physical VMEM.
    vmem_limit = (min(vmem_est + (8 << 20), 56 << 20)
                  if vmem_est > (30 << 20) else None)

    return pl.pallas_call(
        autoenc_kernel,
        out_shape=jax.ShapeDtypeStruct((B, in_dim), jnp.float32),
        grid_spec=pltpu.PrefetchScalarGridSpec(
            num_scalar_prefetch=0,
            grid=grid,
            in_specs=[
                pl.BlockSpec((TB, in_dim), lambda i: (i, 0)),         # x tile
                pl.BlockSpec((in_dim, nodes_pad), lambda i: (0, 0)),  # W0 (VMEM-resident)
                pl.BlockSpec((1, nodes_pad), lambda i: (0, 0)),       # b0
                pl.BlockSpec((nodes_pad, in_dim), lambda i: (0, 0)),  # W1 (VMEM-resident)
                pl.BlockSpec((1, in_dim), lambda i: (0, 0)),          # b1
            ],
            out_specs=pl.BlockSpec((TB, in_dim), lambda i: (i, 0)),
        ),
        compiler_params=pltpu.CompilerParams(
            dimension_semantics=("parallel",),
            vmem_limit_bytes=vmem_limit),
        cost_estimate=cost,
    )(x, w0p, b0p, w1p, b1p)


def init_params(key, nodes=NODES):
    """Deterministic init mirroring PyTorch nn.Linear default:
    U(-1/sqrt(fan_in), 1/sqrt(fan_in)) for both weight and bias."""
    k0w, k0b, k1w, k1b = jax.random.split(key, 4)
    bound0 = 1.0 / jnp.sqrt(IN_DIM)
    bound1 = 1.0 / jnp.sqrt(nodes)
    w0 = jax.random.uniform(k0w, (IN_DIM, nodes), jnp.float32, -bound0, bound0)
    b0 = jax.random.uniform(k0b, (nodes,), jnp.float32, -bound0, bound0)
    w1 = jax.random.uniform(k1w, (nodes, IN_DIM), jnp.float32, -bound1, bound1)
    b1 = jax.random.uniform(k1b, (IN_DIM,), jnp.float32, -bound1, bound1)
    return w0, b0, w1, b1


def reference_forward_mixed(x, w0, b0, w1, b1):
    """Same mixed precision as the kernel (bf16 MXU inputs, f32 accum)."""
    h = jnp.dot(x.astype(jnp.bfloat16), w0.astype(jnp.bfloat16),
                preferred_element_type=jnp.float32) + b0.reshape(1, -1)
    h = jax.nn.sigmoid(h)
    y = jnp.dot(h.astype(jnp.bfloat16), w1.astype(jnp.bfloat16),
                preferred_element_type=jnp.float32) + b1.reshape(1, -1)
    return y


def reference_forward_f32(x, w0, b0, w1, b1):
    h = jax.nn.sigmoid(x @ w0 + b0.reshape(1, -1))
    return h @ w1 + b1.reshape(1, -1)


if __name__ == "__main__":
    key = jax.random.PRNGKey(0)
    kx, kx2, kp = jax.random.split(key, 3)

    w0, b0, w1, b1 = init_params(kp)
    w0p, b0p, w1p, b1p = prepare_params(w0, b0, w1, b1)

    # Small MNIST-like batch of flattened 28x28 images.
    B = 8
    x = jax.random.uniform(kx, (B, IN_DIM), jnp.float32)
    out = jax.block_until_ready(autoenc_forward(x, w0p, b0p, w1p, b1p))
    assert out.shape == (B, IN_DIM)

    ref_mixed = reference_forward_mixed(x, w0, b0, w1, b1)
    assert jnp.allclose(out, ref_mixed, atol=2e-2, rtol=2e-2)
    ref_f32 = reference_forward_f32(x, w0, b0, w1, b1)
    assert jnp.allclose(out, ref_f32, atol=5e-2, rtol=5e-2)

    # Ragged-batch case: B not a multiple of TB exercises Pallas OOB masking.
    B2 = 35
    x2 = jax.random.uniform(kx2, (B2, IN_DIM), jnp.float32)
    out2 = jax.block_until_ready(
        autoenc_forward(x2, w0p, b0p, w1p, b1p, tb=16))
    assert out2.shape == (B2, IN_DIM)
    ref2 = reference_forward_mixed(x2, w0, b0, w1, b1)
    assert jnp.allclose(out2, ref2, atol=2e-2, rtol=2e-2)

    print("KERNEL_OK")
</pallas_src>

<mosaic_0001>
module attributes {stable_mosaic.version = 11 : i64} {
  func.func @autoenc_kernel(%arg0: i32, %arg1: memref<8x784xf32, #tpu.memory_space<vmem>>, %arg2: memref<784x128xbf16, #tpu.memory_space<vmem>>, %arg3: memref<1x128xf32, #tpu.memory_space<vmem>>, %arg4: memref<128x784xbf16, #tpu.memory_space<vmem>>, %arg5: memref<1x784xf32, #tpu.memory_space<vmem>>, %arg6: memref<8x784xf32, #tpu.memory_space<vmem>>) attributes {dimension_semantics = [#tpu.dimension_semantics<parallel>], iteration_bounds = array<i64: 1>, scalar_prefetch = 0 : i64, scratch_operands = 0 : i64, tpu.core_type = #tpu.core_type<tc>, window_params = [{transform_indices = @transform_0, window_bounds = array<i64: 8, 784>}, {pipeline_mode = #tpu.pipeline_mode<synchronous>, transform_indices = @transform_1, window_bounds = array<i64: 784, 128>}, {pipeline_mode = #tpu.pipeline_mode<synchronous>, transform_indices = @transform_2, window_bounds = array<i64: 1, 128>}, {pipeline_mode = #tpu.pipeline_mode<synchronous>, transform_indices = @transform_3, window_bounds = array<i64: 128, 784>}, {pipeline_mode = #tpu.pipeline_mode<synchronous>, transform_indices = @transform_4, window_bounds = array<i64: 1, 784>}, {transform_indices = @transform_5, window_bounds = array<i64: 8, 784>}]} {
    %c0 = arith.constant 0 : index
    %c0_0 = arith.constant 0 : index
    %0 = vector.load %arg1[%c0, %c0_0] : memref<8x784xf32, #tpu.memory_space<vmem>>, vector<8x784xf32>
    %1 = arith.truncf %0 : vector<8x784xf32> to vector<8x784xbf16>
    %c0_1 = arith.constant 0 : index
    %c0_2 = arith.constant 0 : index
    %2 = vector.load %arg2[%c0_1, %c0_2] : memref<784x128xbf16, #tpu.memory_space<vmem>>, vector<784x128xbf16>
    %cst = arith.constant dense<0.000000e+00> : vector<8x128xf32>
    %3 = tpu.matmul %1, %2, %cst {dimension_numbers = #tpu.dot_dimension_numbers<[1], [0], [0], [1], [0, 0, 1, 1], [], []>} : vector<8x784xbf16>, vector<784x128xbf16>, vector<8x128xf32> -> vector<8x128xf32>
    %c0_3 = arith.constant 0 : index
    %c0_4 = arith.constant 0 : index
    %4 = vector.load %arg3[%c0_3, %c0_4] : memref<1x128xf32, #tpu.memory_space<vmem>>, vector<1x128xf32>
    %5 = vector.broadcast %4 : vector<1x128xf32> to vector<8x128xf32>
    %6 = arith.addf %3, %5 : vector<8x128xf32>
    %7 = arith.negf %6 : vector<8x128xf32>
    %8 = math.exp %7 : vector<8x128xf32>
    %cst_5 = arith.constant 1.000000e+00 : f32
    %9 = vector.broadcast %cst_5 : f32 to vector<8x128xf32>
    %10 = arith.addf %9, %8 : vector<8x128xf32>
    %11 = arith.divf %9, %10 : vector<8x128xf32>
    %12 = arith.truncf %11 : vector<8x128xf32> to vector<8x128xbf16>
    %c0_6 = arith.constant 0 : index
    %c0_7 = arith.constant 0 : index
    %13 = vector.load %arg4[%c0_6, %c0_7] : memref<128x784xbf16, #tpu.memory_space<vmem>>, vector<128x784xbf16>
    %cst_8 = arith.constant dense<0.000000e+00> : vector<8x784xf32>
    %14 = tpu.matmul %12, %13, %cst_8 {dimension_numbers = #tpu.dot_dimension_numbers<[1], [0], [0], [1], [0, 0, 1, 1], [], []>} : vector<8x128xbf16>, vector<128x784xbf16>, vector<8x784xf32> -> vector<8x784xf32>
    %c0_9 = arith.constant 0 : index
    %c0_10 = arith.constant 0 : index
    %15 = vector.load %arg5[%c0_9, %c0_10] : memref<1x784xf32, #tpu.memory_space<vmem>>, vector<1x784xf32>
    %16 = vector.broadcast %15 : vector<1x784xf32> to vector<8x784xf32>
    %17 = arith.addf %14, %16 : vector<8x784xf32>
    %c0_11 = arith.constant 0 : index
    %c0_12 = arith.constant 0 : index
    %18 = vector.load %arg6[%c0_11, %c0_12] : memref<8x784xf32, #tpu.memory_space<vmem>>, vector<8x784xf32>
    tpu.vector_store %arg6[%c0_11, %c0_12], %17 {strides = array<i32>} : memref<8x784xf32, #tpu.memory_space<vmem>>, vector<8x784xf32>,
    return
  }
  func.func @transform_0(%arg0: i32) -> (i32, i32) {
    %c0_i32 = arith.constant 0 : i32
    %c0_i32_0 = arith.constant 0 : i32
    return %arg0, %c0_i32 : i32, i32
  }
  func.func @transform_1(%arg0: i32) -> (i32, i32) {
    %c0_i32 = arith.constant 0 : i32
    %c0_i32_0 = arith.constant 0 : i32
    %c0_i32_1 = arith.constant 0 : i32
    return %c0_i32, %c0_i32_0 : i32, i32
  }
  func.func @transform_2(%arg0: i32) -> (i32, i32) {
    %c0_i32 = arith.constant 0 : i32
    %c0_i32_0 = arith.constant 0 : i32
    %c0_i32_1 = arith.constant 0 : i32
    return %c0_i32, %c0_i32_0 : i32, i32
  }
  func.func @transform_3(%arg0: i32) -> (i32, i32) {
    %c0_i32 = arith.constant 0 : i32
    %c0_i32_0 = arith.constant 0 : i32
    %c0_i32_1 = arith.constant 0 : i32
    return %c0_i32, %c0_i32_0 : i32, i32
  }
  func.func @transform_4(%arg0: i32) -> (i32, i32) {
    %c0_i32 = arith.constant 0 : i32
    %c0_i32_0 = arith.constant 0 : i32
    %c0_i32_1 = arith.constant 0 : i32
    return %c0_i32, %c0_i32_0 : i32, i32
  }
  func.func @transform_5(%arg0: i32) -> (i32, i32) {
    %c0_i32 = arith.constant 0 : i32
    %c0_i32_0 = arith.constant 0 : i32
    return %arg0, %c0_i32 : i32, i32
  }
}

</mosaic_0001>

<llo_original>
// kernel: autoenc_forward.1
$region0: #{autoenc_forward.1}
  #allocation0 [shape = 'u32[]', space=smem, size = 0x4, offset = 0x4, fixed_abs, tag = 'smem constant byte address 0x4 - core index']
  #allocation1 [shape = 'u32[144,128]{1,0:T(1,128)}', space=vmem, size = 0x12000, scoped, tag = 'internal scratch']
  %s0 = inlined_call_operand.vmem [shape: f32[8,784], index: 0, kind: input, shape index: {}]
  %s1 = inlined_call_operand.vmem [shape: bf16[784,128], index: 1, kind: input, shape index: {}]
  %s2 = inlined_call_operand.vmem [shape: f32[1,128], index: 2, kind: input, shape index: {}]
  %s3 = inlined_call_operand.vmem [shape: bf16[128,784], index: 3, kind: input, shape index: {}]
  %s4 = inlined_call_operand.vmem [shape: f32[1,784], index: 4, kind: input, shape index: {}]
  %s5 = inlined_call_operand.hbm [shape: f32[8,784], index: 5, kind: output, shape index: {}]
  %s6 = sld [smem:[#allocation0]]
  $region30: #{autoenc_forward.1} parent=0
    _
  %s8 = ssub.s32 1, %s6
  %s9 = scalar_select 0, %s8, %s6
  $region1: #{autoenc_forward.1} parent=0
    #allocation2 [shape = 'u8[28672]{0}', space=vmem, size = 0x7000, scoped, tag = 'output window, operand 0, single buffered']
    #allocation3 [shape = 's32[1]{0}', space=sflag, size = 0x4, scoped, tag = 'scoped memory for autoenc_forward.1']
    %10 = vsyncpa [#allocation3], 0
    // Predicated region
    $region2: #{autoenc_forward.1} parent=1 // pred_check
      _
    $region3: #{autoenc_forward.1} parent=1 // pred_check_branch
      %12 = sbr.rel (0) target = $region5
    $region4: #{autoenc_forward.1} parent=1 // pred_region
      _
    $region5: #{autoenc_forward.1} parent=1 // pred_fallthru
      _
    // Predicated region
    $region6: #{autoenc_forward.1} parent=1 // pred_check
      _
    $region7: #{autoenc_forward.1} parent=1 // pred_check_branch
      %14 = sbr.rel (0) target = $region9
    $region8: #{autoenc_forward.1} parent=1 // pred_region
      _
    $region9: #{autoenc_forward.1} parent=1 // pred_fallthru
      _
    // Predicated region
    $region10: #{autoenc_forward.1} parent=1 // pred_check
      _
    $region11: #{autoenc_forward.1} parent=1 // pred_check_branch
      %16 = sbr.rel (0) target = $region13
    $region12: #{autoenc_forward.1} parent=1 // pred_region
      _
    $region13: #{autoenc_forward.1} parent=1 // pred_fallthru
      _
    // Predicated region
    $region14: #{autoenc_forward.1} parent=1 // pred_check
      _
    $region15: #{autoenc_forward.1} parent=1 // pred_check_branch
      %18 = sbr.rel (0) target = $region17
    $region16: #{autoenc_forward.1} parent=1 // pred_region
      _
    $region17: #{autoenc_forward.1} parent=1 // pred_fallthru
      _
    // Predicated region
    $region18: #{autoenc_forward.1} parent=1 // pred_check
      _
    $region19: #{autoenc_forward.1} parent=1 // pred_check_branch
      %20 = sbr.rel (0) target = $region21
    $region20: #{autoenc_forward.1} parent=1 // pred_region
      _
    $region21: #{autoenc_forward.1} parent=1 // pred_fallthru
      _
    %v22 = vld [vmem:[%s0] sm:$0xff]
    %v23 = vld [vmem:[%s0 + $0x8] sm:$0xff]
    %v24 = vld [vmem:[%s0 + $0x10] sm:$0xff]
    %v25 = vld [vmem:[%s0 + $0x18] sm:$0xff]
    %v26 = vld [vmem:[%s0 + $0x20] sm:$0xff]
    %v27 = vld [vmem:[%s0 + $0x28] sm:$0xff]
    %v28 = vld [vmem:[%s0 + $0x30] sm:$0xff]
    %v29 = vpack.c.bf16 %v22, %v22
    %v30 = vpack.c.bf16 %v23, %v23
    %v31 = vpack.c.bf16 %v24, %v24
    %v32 = vpack.c.bf16 %v25, %v25
    %v33 = vpack.c.bf16 %v26, %v26
    %v34 = vpack.c.bf16 %v27, %v27
    %v35 = vpack.c.bf16 %v28, %v28
    %v36 = vld [vmem:[%s1] sm:$0xf]
    %v37 = vld [vmem:[%s1 + $0x4] sm:$0xf]
    %v38 = vld [vmem:[%s1 + $0x8] sm:$0xf]
    %v39 = vld [vmem:[%s1 + $0xc] sm:$0xf]
    %v40 = vld [vmem:[%s1 + $0x10] sm:$0xf]
    %v41 = vld [vmem:[%s1 + $0x14] sm:$0xf]
    %v42 = vld [vmem:[%s1 + $0x18] sm:$0xf]
    %v43 = vld [vmem:[%s1 + $0x1c] sm:$0xf]
    %v44 = vld [vmem:[%s1 + $0x20] sm:$0xf]
    %v45 = vld [vmem:[%s1 + $0x24] sm:$0xf]
    %v46 = vld [vmem:[%s1 + $0x28] sm:$0xf]
    %v47 = vld [vmem:[%s1 + $0x2c] sm:$0xf]
    %v48 = vld [vmem:[%s1 + $0x30] sm:$0xf]
    %v49 = vld [vmem:[%s1 + $0x34] sm:$0xf]
    %v50 = vld [vmem:[%s1 + $0x38] sm:$0xf]
    %v51 = vld [vmem:[%s1 + $0x3c] sm:$0xf]
    %v52 = vld [vmem:[%s1 + $0x40] sm:$0xf]
    %v53 = vld [vmem:[%s1 + $0x44] sm:$0xf]
    %v54 = vld [vmem:[%s1 + $0x48] sm:$0xf]
    %v55 = vld [vmem:[%s1 + $0x4c] sm:$0xf]
    %v56 = vld [vmem:[%s1 + $0x50] sm:$0xf]
    %v57 = vld [vmem:[%s1 + $0x54] sm:$0xf]
    %v58 = vld [vmem:[%s1 + $0x58] sm:$0xf]
    %v59 = vld [vmem:[%s1 + $0x5c] sm:$0xf]
    %v60 = vld [vmem:[%s1 + $0x60] sm:$0xf]
    %v61 = vld [vmem:[%s1 + $0x64] sm:$0xf]
    %v62 = vld [vmem:[%s1 + $0x68] sm:$0xf]
    %v63 = vld [vmem:[%s1 + $0x6c] sm:$0xf]
    %v64 = vld [vmem:[%s1 + $0x70] sm:$0xf]
    %v65 = vld [vmem:[%s1 + $0x74] sm:$0xf]
    %v66 = vld [vmem:[%s1 + $0x78] sm:$0xf]
    %v67 = vld [vmem:[%s1 + $0x7c] sm:$0xf]
    %v68 = vld [vmem:[%s1 + $0x80] sm:$0xf]
    %v69 = vld [vmem:[%s1 + $0x84] sm:$0xf]
    %v70 = vld [vmem:[%s1 + $0x88] sm:$0xf]
    %v71 = vld [vmem:[%s1 + $0x8c] sm:$0xf]
    %v72 = vld [vmem:[%s1 + $0x90] sm:$0xf]
    %v73 = vld [vmem:[%s1 + $0x94] sm:$0xf]
    %v74 = vld [vmem:[%s1 + $0x98] sm:$0xf]
    %v75 = vld [vmem:[%s1 + $0x9c] sm:$0xf]
    %v76 = vld [vmem:[%s1 + $0xa0] sm:$0xf]
    %v77 = vld [vmem:[%s1 + $0xa4] sm:$0xf]
    %v78 = vld [vmem:[%s1 + $0xa8] sm:$0xf]
    %v79 = vld [vmem:[%s1 + $0xac] sm:$0xf]
    %v80 = vld [vmem:[%s1 + $0xb0] sm:$0xf]
    %v81 = vld [vmem:[%s1 + $0xb4] sm:$0xf]
    %v82 = vld [vmem:[%s1 + $0xb8] sm:$0xf]
    %v83 = vld [vmem:[%s1 + $0xbc] sm:$0xf]
    %v84 = vld [vmem:[%s1 + $0xc0] sm:$0xf]
    %v85 = vld [vmem:[%s1 + $0xc4] sm:$0xf]
    %v86 = vld [vmem:[%s1 + $0xc8] sm:$0xf]
    %v87 = vld [vmem:[%s1 + $0xcc] sm:$0xf]
    %v88 = vld [vmem:[%s1 + $0xd0] sm:$0xf]
    %v89 = vld [vmem:[%s1 + $0xd4] sm:$0xf]
    %v90 = vld [vmem:[%s1 + $0xd8] sm:$0xf]
    %v91 = vld [vmem:[%s1 + $0xdc] sm:$0xf]
    %v92 = vld [vmem:[%s1 + $0xe0] sm:$0xf]
    %v93 = vld [vmem:[%s1 + $0xe4] sm:$0xf]
    %v94 = vld [vmem:[%s1 + $0xe8] sm:$0xf]
    %v95 = vld [vmem:[%s1 + $0xec] sm:$0xf]
    %v96 = vld [vmem:[%s1 + $0xf0] sm:$0xf]
    %v97 = vld [vmem:[%s1 + $0xf4] sm:$0xf]
    %v98 = vld [vmem:[%s1 + $0xf8] sm:$0xf]
    %v99 = vld [vmem:[%s1 + $0xfc] sm:$0xf]
    %v100 = vld [vmem:[%s1 + $0x100] sm:$0xf]
    %v101 = vld [vmem:[%s1 + $0x104] sm:$0xf]
    %v102 = vld [vmem:[%s1 + $0x108] sm:$0xf]
    %v103 = vld [vmem:[%s1 + $0x10c] sm:$0xf]
    %v104 = vld [vmem:[%s1 + $0x110] sm:$0xf]
    %v105 = vld [vmem:[%s1 + $0x114] sm:$0xf]
    %v106 = vld [vmem:[%s1 + $0x118] sm:$0xf]
    %v107 = vld [vmem:[%s1 + $0x11c] sm:$0xf]
    %v108 = vld [vmem:[%s1 + $0x120] sm:$0xf]
    %v109 = vld [vmem:[%s1 + $0x124] sm:$0xf]
    %v110 = vld [vmem:[%s1 + $0x128] sm:$0xf]
    %v111 = vld [vmem:[%s1 + $0x12c] sm:$0xf]
    %v112 = vld [vmem:[%s1 + $0x130] sm:$0xf]
    %v113 = vld [vmem:[%s1 + $0x134] sm:$0xf]
    %v114 = vld [vmem:[%s1 + $0x138] sm:$0xf]
    %v115 = vld [vmem:[%s1 + $0x13c] sm:$0xf]
    %v116 = vld [vmem:[%s1 + $0x140] sm:$0xf]
    %v117 = vld [vmem:[%s1 + $0x144] sm:$0xf]
    %v118 = vld [vmem:[%s1 + $0x148] sm:$0xf]
    %v119 = vld [vmem:[%s1 + $0x14c] sm:$0xf]
    %v120 = vld [vmem:[%s1 + $0x150] sm:$0xf]
    %v121 = vld [vmem:[%s1 + $0x154] sm:$0xf]
    %v122 = vld [vmem:[%s1 + $0x158] sm:$0xf]
    %v123 = vld [vmem:[%s1 + $0x15c] sm:$0xf]
    %v124 = vld [vmem:[%s1 + $0x160] sm:$0xf]
    %v125 = vld [vmem:[%s1 + $0x164] sm:$0xf]
    %v126 = vld [vmem:[%s1 + $0x168] sm:$0xf]
    %v127 = vld [vmem:[%s1 + $0x16c] sm:$0xf]
    %v128 = vld [vmem:[%s1 + $0x170] sm:$0xf]
    %v129 = vld [vmem:[%s1 + $0x174] sm:$0xf]
    %v130 = vld [vmem:[%s1 + $0x178] sm:$0xf]
    %v131 = vld [vmem:[%s1 + $0x17c] sm:$0xf]
    %v132 = vld [vmem:[%s1 + $0x180] sm:$0xf]
    %v133 = vld [vmem:[%s1 + $0x184] sm:$0xf]
    %v134 = vld [vmem:[%s2] sm:$0x1]
    %v136 = vlaneseq
    %v137 = vshrl.u32 %v136, 7
    %v138 = vsub.s32 0, %v137
    %v139 = vrot.slane %v134, %v138
    %v239 = vunpack.c.l.b16 %v36
    %v240 = vunpack.c.l.b16 %v37
    %v241 = vunpack.c.l.b16 %v38
    %v242 = vunpack.c.l.b16 %v39
    %v243 = vunpack.c.l.b16 %v40
    %v244 = vunpack.c.l.b16 %v41
    %v245 = vunpack.c.l.b16 %v42
    %v246 = vunpack.c.l.b16 %v43
    %v247 = vunpack.c.l.b16 %v44
    %v248 = vunpack.c.l.b16 %v45
    %v249 = vunpack.c.l.b16 %v46
    %v250 = vunpack.c.l.b16 %v47
    %v251 = vunpack.c.l.b16 %v48
    %v252 = vunpack.c.l.b16 %v49
    %v253 = vunpack.c.l.b16 %v50
    %v254 = vunpack.c.l.b16 %v51
    %v255 = vunpack.c.l.b16 %v52
    %v256 = vunpack.c.l.b16 %v53
    %v257 = vunpack.c.l.b16 %v54
    %v258 = vunpack.c.l.b16 %v55
    %v259 = vunpack.c.l.b16 %v56
    %v260 = vunpack.c.l.b16 %v57
    %v261 = vunpack.c.l.b16 %v58
    %v262 = vunpack.c.l.b16 %v59
    %v263 = vunpack.c.l.b16 %v60
    %v264 = vunpack.c.l.b16 %v61
    %v265 = vunpack.c.l.b16 %v62
    %v266 = vunpack.c.l.b16 %v63
    %v267 = vunpack.c.l.b16 %v64
    %v268 = vunpack.c.l.b16 %v65
    %v269 = vunpack.c.l.b16 %v66
    %v270 = vunpack.c.l.b16 %v67
    %v271 = vunpack.c.l.b16 %v68
    %v272 = vunpack.c.l.b16 %v69
    %v273 = vunpack.c.l.b16 %v70
    %v274 = vunpack.c.l.b16 %v71
    %v275 = vunpack.c.l.b16 %v72
    %v276 = vunpack.c.l.b16 %v73
    %v277 = vunpack.c.l.b16 %v74
    %v278 = vunpack.c.l.b16 %v75
    %v279 = vunpack.c.l.b16 %v76
    %v280 = vunpack.c.l.b16 %v77
    %v281 = vunpack.c.l.b16 %v78
    %v282 = vunpack.c.l.b16 %v79
    %v283 = vunpack.c.l.b16 %v80
    %v284 = vunpack.c.l.b16 %v81
    %v285 = vunpack.c.l.b16 %v82
    %v286 = vunpack.c.l.b16 %v83
    %v287 = vunpack.c.l.b16 %v84
    %v288 = vunpack.c.l.b16 %v85
    %v289 = vunpack.c.l.b16 %v86
    %v290 = vunpack.c.l.b16 %v87
    %v291 = vunpack.c.l.b16 %v88
    %v292 = vunpack.c.l.b16 %v89
    %v293 = vunpack.c.l.b16 %v90
    %v294 = vunpack.c.l.b16 %v91
    %v295 = vunpack.c.l.b16 %v92
    %v296 = vunpack.c.l.b16 %v93
    %v297 = vunpack.c.l.b16 %v94
    %v298 = vunpack.c.l.b16 %v95
    %v299 = vunpack.c.l.b16 %v96
    %v300 = vunpack.c.l.b16 %v97
    %v301 = vunpack.c.l.b16 %v98
    %v302 = vunpack.c.l.b16 %v99
    %v303 = vunpack.c.l.b16 %v100
    %v304 = vunpack.c.l.b16 %v101
    %v305 = vunpack.c.l.b16 %v102
    %v306 = vunpack.c.l.b16 %v103
    %v307 = vunpack.c.l.b16 %v104
    %v308 = vunpack.c.l.b16 %v105
    %v309 = vunpack.c.l.b16 %v106
    %v310 = vunpack.c.l.b16 %v107
    %v311 = vunpack.c.l.b16 %v108
    %v312 = vunpack.c.l.b16 %v109
    %v313 = vunpack.c.l.b16 %v110
    %v314 = vunpack.c.l.b16 %v111
    %v315 = vunpack.c.l.b16 %v112
    %v316 = vunpack.c.l.b16 %v113
    %v317 = vunpack.c.l.b16 %v114
    %v318 = vunpack.c.l.b16 %v115
    %v319 = vunpack.c.l.b16 %v116
    %v320 = vunpack.c.l.b16 %v117
    %v321 = vunpack.c.l.b16 %v118
    %v322 = vunpack.c.l.b16 %v119
    %v323 = vunpack.c.l.b16 %v120
    %v324 = vunpack.c.l.b16 %v121
    %v325 = vunpack.c.l.b16 %v122
    %v326 = vunpack.c.l.b16 %v123
    %v327 = vunpack.c.l.b16 %v124
    %v328 = vunpack.c.l.b16 %v125
    %v329 = vunpack.c.l.b16 %v126
    %v330 = vunpack.c.l.b16 %v127
    %v331 = vunpack.c.l.b16 %v128
    %v332 = vunpack.c.l.b16 %v129
    %v333 = vunpack.c.l.b16 %v130
    %v334 = vunpack.c.l.b16 %v131
    %v335 = vunpack.c.l.b16 %v132
    %v336 = vunpack.c.l.b16 %v133
    %v337 = vpack.c.b16 %v240, %v239
    %v338 = vpack.c.b16 %v242, %v241
    %v339 = vpack.c.b16 %v244, %v243
    %v340 = vpack.c.b16 %v246, %v245
    %v341 = vpack.c.b16 %v248, %v247
    %v342 = vpack.c.b16 %v250, %v249
    %v343 = vpack.c.b16 %v252, %v251
    %v344 = vpack.c.b16 %v254, %v253
    %v345 = vpack.c.b16 %v256, %v255
    %v346 = vpack.c.b16 %v258, %v257
    %v347 = vpack.c.b16 %v260, %v259
    %v348 = vpack.c.b16 %v262, %v261
    %v349 = vpack.c.b16 %v264, %v263
    %v350 = vpack.c.b16 %v266, %v265
    %v351 = vpack.c.b16 %v268, %v267
    %v352 = vpack.c.b16 %v270, %v269
    %v353 = vpack.c.b16 %v272, %v271
    %v354 = vpack.c.b16 %v274, %v273
    %v355 = vpack.c.b16 %v276, %v275
    %v356 = vpack.c.b16 %v278, %v277
    %v357 = vpack.c.b16 %v280, %v279
    %v358 = vpack.c.b16 %v282, %v281
    %v359 = vpack.c.b16 %v284, %v283
    %v360 = vpack.c.b16 %v286, %v285
    %v361 = vpack.c.b16 %v288, %v287
    %v362 = vpack.c.b16 %v290, %v289
    %v363 = vpack.c.b16 %v292, %v291
    %v364 = vpack.c.b16 %v294, %v293
    %v365 = vpack.c.b16 %v296, %v295
    %v366 = vpack.c.b16 %v298, %v297
    %v367 = vpack.c.b16 %v300, %v299
    %v368 = vpack.c.b16 %v302, %v301
    %v369 = vpack.c.b16 %v304, %v303
    %v370 = vpack.c.b16 %v306, %v305
    %v371 = vpack.c.b16 %v308, %v307
    %v372 = vpack.c.b16 %v310, %v309
    %v373 = vpack.c.b16 %v312, %v311
    %v374 = vpack.c.b16 %v314, %v313
    %v375 = vpack.c.b16 %v316, %v315
    %v376 = vpack.c.b16 %v318, %v317
    %v377 = vpack.c.b16 %v320, %v319
    %v378 = vpack.c.b16 %v322, %v321
    %v379 = vpack.c.b16 %v324, %v323
    %v380 = vpack.c.b16 %v326, %v325
    %v381 = vpack.c.b16 %v328, %v327
    %v382 = vpack.c.b16 %v330, %v329
    %v383 = vpack.c.b16 %v332, %v331
    %v384 = vpack.c.b16 %v334, %v333
    %v385 = vpack.c.b16 %v336, %v335
    %vm435 = vcmask 130048
    %v437 = vsel %vm435, %v35, 0
    %439 = vmatprep.subr.bf16.mxu0 0
    %440 = vmatpush1.bf16.msra.mxu0 %v344
    %441 = vmatprep.subr.bf16.mxu0 0
    %442 = vmatpush1.bf16.msra.mxu0 %v343
    %443 = vmatprep.subr.bf16.mxu0 0
    %444 = vmatpush1.bf16.msra.mxu0 %v342
    %445 = vmatprep.subr.bf16.mxu0 0
    %446 = vmatpush1.bf16.msra.mxu0 %v341
    %447 = vmatprep.subr.bf16.mxu0 0
    %448 = vmatpush1.bf16.msra.mxu0 %v340
    %449 = vmatprep.subr.bf16.mxu0 0
    %450 = vmatpush1.bf16.msra.mxu0 %v339
    %451 = vmatprep.subr.bf16.mxu0 0
    %452 = vmatpush1.bf16.msra.mxu0 %v338
    %453 = vmatprep.subr.bf16.mxu0 0
    %454 = vmatpush1.bf16.msra.mxu0 %v337
    %455 = vmatprep.subr.bf16.mxu0 0
    %456 = vmatpush2.bf16.msra.mxu0 %v352
    %457 = vmatprep.subr.bf16.mxu0 0
    %458 = vmatpush2.bf16.msra.mxu0 %v351
    %459 = vmatprep.subr.bf16.mxu0 0
    %460 = vmatpush2.bf16.msra.mxu0 %v350
    %461 = vmatprep.subr.bf16.mxu0 0
    %462 = vmatpush2.bf16.msra.mxu0 %v349
    %463 = vmatprep.subr.bf16.mxu0 0
    %464 = vmatpush2.bf16.msra.mxu0 %v348
    %465 = vmatprep.subr.bf16.mxu0 0
    %466 = vmatpush2.bf16.msra.mxu0 %v347
    %467 = vmatprep.subr.bf16.mxu0 0
    %468 = vmatpush2.bf16.msra.mxu0 %v346
    %469 = vmatprep.subr.bf16.mxu0 0
    %470 = vmatpush2.bf16.msra.mxu0 %v345
    %471 = vmatprep.mubr.bf16.mxu0 %v30
    %472 = vmatmul.mubr.bf16.gmra.mxu0 %v29
    %v473 = vpop.f32.mrf.mxu0
    %v474 = vadd.f32 %v139, %v473
    %v475 = vpop.f32.mrf.mxu0
    %v476 = vpop.f32.mrf.mxu0
    %v477 = vpop.f32.mrf.mxu0
    %478 = vdwg.mxu0
    %479 = vmatprep.subr.bf16.mxu0 0
    %480 = vmatpush1.bf16.msra.mxu0 %v360
    %481 = vmatprep.subr.bf16.mxu0 0
    %482 = vmatpush1.bf16.msra.mxu0 %v359
    %483 = vmatprep.subr.bf16.mxu0 0
    %484 = vmatpush1.bf16.msra.mxu0 %v358
    %485 = vmatprep.subr.bf16.mxu0 0
    %486 = vmatpush1.bf16.msra.mxu0 %v357
    %487 = vmatprep.subr.bf16.mxu0 0
    %488 = vmatpush1.bf16.msra.mxu0 %v356
    %489 = vmatprep.subr.bf16.mxu0 0
    %490 = vmatpush1.bf16.msra.mxu0 %v355
    %491 = vmatprep.subr.bf16.mxu0 0
    %492 = vmatpush1.bf16.msra.mxu0 %v354
    %493 = vmatprep.subr.bf16.mxu0 0
    %494 = vmatpush1.bf16.msra.mxu0 %v353
    %495 = vmatprep.subr.bf16.mxu0 0
    %496 = vmatpush2.bf16.msra.mxu0 %v368
    %497 = vmatprep.subr.bf16.mxu0 0
    %498 = vmatpush2.bf16.msra.mxu0 %v367
    %499 = vmatprep.subr.bf16.mxu0 0
    %500 = vmatpush2.bf16.msra.mxu0 %v366
    %501 = vmatprep.subr.bf16.mxu0 0
    %502 = vmatpush2.bf16.msra.mxu0 %v365
    %503 = vmatprep.subr.bf16.mxu0 0
    %504 = vmatpush2.bf16.msra.mxu0 %v364
    %505 = vmatprep.subr.bf16.mxu0 0
    %506 = vmatpush2.bf16.msra.mxu0 %v363
    %507 = vmatprep.subr.bf16.mxu0 0
    %508 = vmatpush2.bf16.msra.mxu0 %v362
    %509 = vmatprep.subr.bf16.mxu0 0
    %510 = vmatpush2.bf16.msra.mxu0 %v361
    %511 = vmatprep.mubr.bf16.mxu0 %v32
    %512 = vmatmul.mubr.bf16.gmra.mxu0 %v31
    %v513 = vpop.f32.mrf.mxu0
    %v514 = vadd.f32 %v474, %v513
    %v515 = vpop.f32.mrf.mxu0
    %v516 = vpop.f32.mrf.mxu0
    %v517 = vpop.f32.mrf.mxu0
    %518 = vdwg.mxu0
    %519 = vmatprep.subr.bf16.mxu0 0
    %520 = vmatpush1.bf16.msra.mxu0 %v376
    %521 = vmatprep.subr.bf16.mxu0 0
    %522 = vmatpush1.bf16.msra.mxu0 %v375
    %523 = vmatprep.subr.bf16.mxu0 0
    %524 = vmatpush1.bf16.msra.mxu0 %v374
    %525 = vmatprep.subr.bf16.mxu0 0
    %526 = vmatpush1.bf16.msra.mxu0 %v373
    %527 = vmatprep.subr.bf16.mxu0 0
    %528 = vmatpush1.bf16.msra.mxu0 %v372
    %529 = vmatprep.subr.bf16.mxu0 0
    %530 = vmatpush1.bf16.msra.mxu0 %v371
    %531 = vmatprep.subr.bf16.mxu0 0
    %532 = vmatpush1.bf16.msra.mxu0 %v370
    %533 = vmatprep.subr.bf16.mxu0 0
    %534 = vmatpush1.bf16.msra.mxu0 %v369
    %535 = vmatprep.subr.bf16.mxu0 0
    %536 = vmatpush2.bf16.msra.mxu0 %v384
    %537 = vmatprep.subr.bf16.mxu0 0
    %538 = vmatpush2.bf16.msra.mxu0 %v383
    %539 = vmatprep.subr.bf16.mxu0 0
    %540 = vmatpush2.bf16.msra.mxu0 %v382
    %541 = vmatprep.subr.bf16.mxu0 0
    %542 = vmatpush2.bf16.msra.mxu0 %v381
    %543 = vmatprep.subr.bf16.mxu0 0
    %544 = vmatpush2.bf16.msra.mxu0 %v380
    %545 = vmatprep.subr.bf16.mxu0 0
    %546 = vmatpush2.bf16.msra.mxu0 %v379
    %547 = vmatprep.subr.bf16.mxu0 0
    %548 = vmatpush2.bf16.msra.mxu0 %v378
    %549 = vmatprep.subr.bf16.mxu0 0
    %550 = vmatpush2.bf16.msra.mxu0 %v377
    %551 = vmatprep.mubr.bf16.mxu0 %v34
    %552 = vmatmul.mubr.bf16.gmra.mxu0 %v33
    %v553 = vpop.f32.mrf.mxu0
    %v554 = vadd.f32 %v514, %v553
    %v555 = vpop.f32.mrf.mxu0
    %v556 = vpop.f32.mrf.mxu0
    %v557 = vpop.f32.mrf.mxu0
    %558 = vdwg.mxu0
    %559 = vmatprep.subr.bf16.mxu0 0
    %560 = vmatpush1.bf16.msra.mxu0 0
    %561 = vmatprep.subr.bf16.mxu0 0
    %562 = vmatpush1.bf16.msra.mxu0 0
    %563 = vmatprep.subr.bf16.mxu0 0
    %564 = vmatpush1.bf16.msra.mxu0 0
    %565 = vmatprep.subr.bf16.mxu0 0
    %566 = vmatpush1.bf16.msra.mxu0 0
    %567 = vmatprep.subr.bf16.mxu0 0
    %568 = vmatpush1.bf16.msra.mxu0 0
    %569 = vmatprep.subr.bf16.mxu0 0
    %570 = vmatpush1.bf16.msra.mxu0 0
    %571 = vmatprep.subr.bf16.mxu0 0
    %572 = vmatpush1.bf16.msra.mxu0 0
    %573 = vmatprep.subr.bf16.mxu0 0
    %574 = vmatpush1.bf16.msra.mxu0 %v385
    %575 = vmatprep.subr.bf16.mxu0 0
    %576 = vmatpush2.bf16.msra.mxu0 0
    %577 = vmatprep.subr.bf16.mxu0 0
    %578 = vmatpush2.bf16.msra.mxu0 0
    %579 = vmatprep.subr.bf16.mxu0 0
    %580 = vmatpush2.bf16.msra.mxu0 0
    %581 = vmatprep.subr.bf16.mxu0 0
    %582 = vmatpush2.bf16.msra.mxu0 0
    %583 = vmatprep.subr.bf16.mxu0 0
    %584 = vmatpush2.bf16.msra.mxu0 0
    %585 = vmatprep.subr.bf16.mxu0 0
    %586 = vmatpush2.bf16.msra.mxu0 0
    %587 = vmatprep.subr.bf16.mxu0 0
    %588 = vmatpush2.bf16.msra.mxu0 0
    %589 = vmatprep.subr.bf16.mxu0 0
    %590 = vmatpush2.bf16.msra.mxu0 0
    %591 = vmatprep.mubr.bf16.mxu0 0
    %592 = vmatmul.mubr.bf16.gmra.mxu0 %v437
    %v593 = vpop.f32.mrf.mxu0
    %v594 = vadd.f32 %v554, %v593
    %v595 = vpop.f32.mrf.mxu0
    %v596 = vpop.f32.mrf.mxu0
    %v597 = vpop.f32.mrf.mxu0
    %598 = vdwg.mxu0
    %v599 = vxor.u32 %v594, 2147483648
    %v600 = vmul.f32 %v599, 1.442695
    %v601 = vpow.pop %v600
    %v602 = vadd.f32 %v601, 1.0
    %v603 = vrcp.pop %v602
    %v604 = vmul.f32 1.0, %v603
    %v605 = vpack.c.bf16 %v604, %v604
    %v606 = vld [vmem:[%s3] sm:$0xff]
    %v607 = vld [vmem:[%s3 + $0x8] sm:$0xff]
    %v608 = vld [vmem:[%s3 + $0x10] sm:$0xff]
    %v609 = vld [vmem:[%s3 + $0x18] sm:$0xf]
    %v610 = vld [vmem:[%s3 + $0x1c] sm:$0xff]
    %v611 = vld [vmem:[%s3 + $0x24] sm:$0xff]
    %v612 = vld [vmem:[%s3 + $0x2c] sm:$0xff]
    %v613 = vld [vmem:[%s3 + $0x34] sm:$0xf]
    %v614 = vld [vmem:[%s3 + $0x38] sm:$0xff]
    %v615 = vld [vmem:[%s3 + $0x40] sm:$0xff]
    %v616 = vld [vmem:[%s3 + $0x48] sm:$0xff]
    %v617 = vld [vmem:[%s3 + $0x50] sm:$0xf]
    %v618 = vld [vmem:[%s3 + $0x54] sm:$0xff]
    %v619 = vld [vmem:[%s3 + $0x5c] sm:$0xff]
    %v620 = vld [vmem:[%s3 + $0x64] sm:$0xff]
    %v621 = vld [vmem:[%s3 + $0x6c] sm:$0xf]
    %v622 = vld [vmem:[%s3 + $0x70] sm:$0xff]
    %v623 = vld [vmem:[%s3 + $0x78] sm:$0xff]
    %v624 = vld [vmem:[%s3 + $0x80] sm:$0xff]
    %v625 = vld [vmem:[%s3 + $0x88] sm:$0xf]
    %v626 = vld [vmem:[%s3 + $0x8c] sm:$0xff]
    %v627 = vld [vmem:[%s3 + $0x94] sm:$0xff]
    %v628 = vld [vmem:[%s3 + $0x9c] sm:$0xff]
    %v629 = vld [vmem:[%s3 + $0xa4] sm:$0xf]
    %v630 = vld [vmem:[%s3 + $0xa8] sm:$0xff]
    %v631 = vld [vmem:[%s3 + $0xb0] sm:$0xff]
    %v632 = vld [vmem:[%s3 + $0xb8] sm:$0xff]
    %v633 = vld [vmem:[%s3 + $0xc0] sm:$0xf]
    %v634 = vld [vmem:[%s3 + $0xc4] sm:$0xff]
    %v635 = vld [vmem:[%s3 + $0xcc] sm:$0xff]
    %v636 = vld [vmem:[%s3 + $0xd4] sm:$0xff]
    %v637 = vld [vmem:[%s3 + $0xdc] sm:$0xf]
    %v638 = vld [vmem:[%s3 + $0xe0] sm:$0xff]
    %v639 = vld [vmem:[%s3 + $0xe8] sm:$0xff]
    %v640 = vld [vmem:[%s3 + $0xf0] sm:$0xff]
    %v641 = vld [vmem:[%s3 + $0xf8] sm:$0xf]
    %v642 = vld [vmem:[%s3 + $0xfc] sm:$0xff]
    %v643 = vld [vmem:[%s3 + $0x104] sm:$0xff]
    %v644 = vld [vmem:[%s3 + $0x10c] sm:$0xff]
    %v645 = vld [vmem:[%s3 + $0x114] sm:$0xf]
    %v646 = vld [vmem:[%s3 + $0x118] sm:$0xff]
    %v647 = vld [vmem:[%s3 + $0x120] sm:$0xff]
    %v648 = vld [vmem:[%s3 + $0x128] sm:$0xff]
    %v649 = vld [vmem:[%s3 + $0x130] sm:$0xf]
    %v650 = vld [vmem:[%s3 + $0x134] sm:$0xff]
    %v651 = vld [vmem:[%s3 + $0x13c] sm:$0xff]
    %v652 = vld [vmem:[%s3 + $0x144] sm:$0xff]
    %v653 = vld [vmem:[%s3 + $0x14c] sm:$0xf]
    %v654 = vld [vmem:[%s3 + $0x150] sm:$0xff]
    %v655 = vld [vmem:[%s3 + $0x158] sm:$0xff]
    %v656 = vld [vmem:[%s3 + $0x160] sm:$0xff]
    %v657 = vld [vmem:[%s3 + $0x168] sm:$0xf]
    %v658 = vld [vmem:[%s3 + $0x16c] sm:$0xff]
    %v659 = vld [vmem:[%s3 + $0x174] sm:$0xff]
    %v660 = vld [vmem:[%s3 + $0x17c] sm:$0xff]
    %v661 = vld [vmem:[%s3 + $0x184] sm:$0xf]
    %v662 = vld [vmem:[%s3 + $0x188] sm:$0xff]
    %v663 = vld [vmem:[%s3 + $0x190] sm:$0xff]
    %v664 = vld [vmem:[%s3 + $0x198] sm:$0xff]
    %v665 = vld [vmem:[%s3 + $0x1a0] sm:$0xf]
    %v666 = vld [vmem:[%s3 + $0x1a4] sm:$0xff]
    %v667 = vld [vmem:[%s3 + $0x1ac] sm:$0xff]
    %v668 = vld [vmem:[%s3 + $0x1b4] sm:$0xff]
    %v669 = vld [vmem:[%s3 + $0x1bc] sm:$0xf]
    %v670 = vld [vmem:[%s4] sm:$0x7f]
    %v672 = vlaneseq
    %v673 = vshrl.u32 %v672, 7
    %v674 = vsub.s32 0, %v673
    %v675 = vrot.slane %v670, %v674
    %v676 = vlaneseq
    %v677 = vshrl.u32 %v676, 7
    %v678 = vsub.s32 1, %v677
    %v679 = vrot.slane %v670, %v678
    %v680 = vlaneseq
    %v681 = vshrl.u32 %v680, 7
    %v682 = vsub.s32 2, %v681
    %v683 = vrot.slane %v670, %v682
    %v684 = vlaneseq
    %v685 = vshrl.u32 %v684, 7
    %v686 = vsub.s32 3, %v685
    %v687 = vrot.slane %v670, %v686
    %v688 = vlaneseq
    %v689 = vshrl.u32 %v688, 7
    %v690 = vsub.s32 4, %v689
    %v691 = vrot.slane %v670, %v690
    %v692 = vlaneseq
    %v693 = vshrl.u32 %v692, 7
    %v694 = vsub.s32 5, %v693
    %v695 = vrot.slane %v670, %v694
    %v696 = vlaneseq
    %v697 = vshrl.u32 %v696, 7
    %v698 = vsub.s32 6, %v697
    %v699 = vrot.slane %v670, %v698
    %v771 = vunpack.c.l.b16 %v606
    %v772 = vunpack.c.h.b16 %v606
    %v773 = vunpack.c.l.b16 %v607
    %v774 = vunpack.c.h.b16 %v607
    %v775 = vunpack.c.l.b16 %v608
    %v776 = vunpack.c.h.b16 %v608
    %v777 = vunpack.c.l.b16 %v609
    %v778 = vunpack.c.l.b16 %v610
    %v779 = vunpack.c.h.b16 %v610
    %v780 = vunpack.c.l.b16 %v611
    %v781 = vunpack.c.h.b16 %v611
    %v782 = vunpack.c.l.b16 %v612
    %v783 = vunpack.c.h.b16 %v612
    %v784 = vunpack.c.l.b16 %v613
    %v785 = vunpack.c.l.b16 %v614
    %v786 = vunpack.c.h.b16 %v614
    %v787 = vunpack.c.l.b16 %v615
    %v788 = vunpack.c.h.b16 %v615
    %v789 = vunpack.c.l.b16 %v616
    %v790 = vunpack.c.h.b16 %v616
    %v791 = vunpack.c.l.b16 %v617
    %v792 = vunpack.c.l.b16 %v618
    %v793 = vunpack.c.h.b16 %v618
    %v794 = vunpack.c.l.b16 %v619
    %v795 = vunpack.c.h.b16 %v619
    %v796 = vunpack.c.l.b16 %v620
    %v797 = vunpack.c.h.b16 %v620
    %v798 = vunpack.c.l.b16 %v621
    %v799 = vunpack.c.l.b16 %v622
    %v800 = vunpack.c.h.b16 %v622
    %v801 = vunpack.c.l.b16 %v623
    %v802 = vunpack.c.h.b16 %v623
    %v803 = vunpack.c.l.b16 %v624
    %v804 = vunpack.c.h.b16 %v624
    %v805 = vunpack.c.l.b16 %v625
    %v806 = vunpack.c.l.b16 %v626
    %v807 = vunpack.c.h.b16 %v626
    %v808 = vunpack.c.l.b16 %v627
    %v809 = vunpack.c.h.b16 %v627
    %v810 = vunpack.c.l.b16 %v628
    %v811 = vunpack.c.h.b16 %v628
    %v812 = vunpack.c.l.b16 %v629
    %v813 = vunpack.c.l.b16 %v630
    %v814 = vunpack.c.h.b16 %v630
    %v815 = vunpack.c.l.b16 %v631
    %v816 = vunpack.c.h.b16 %v631
    %v817 = vunpack.c.l.b16 %v632
    %v818 = vunpack.c.h.b16 %v632
    %v819 = vunpack.c.l.b16 %v633
    %v820 = vunpack.c.l.b16 %v634
    %v821 = vunpack.c.h.b16 %v634
    %v822 = vunpack.c.l.b16 %v635
    %v823 = vunpack.c.h.b16 %v635
    %v824 = vunpack.c.l.b16 %v636
    %v825 = vunpack.c.h.b16 %v636
    %v826 = vunpack.c.l.b16 %v637
    %v827 = vunpack.c.l.b16 %v638
    %v828 = vunpack.c.h.b16 %v638
    %v829 = vunpack.c.l.b16 %v639
    %v830 = vunpack.c.h.b16 %v639
    %v831 = vunpack.c.l.b16 %v640
    %v832 = vunpack.c.h.b16 %v640
    %v833 = vunpack.c.l.b16 %v641
    %v834 = vunpack.c.l.b16 %v642
    %v835 = vunpack.c.h.b16 %v642
    %v836 = vunpack.c.l.b16 %v643
    %v837 = vunpack.c.h.b16 %v643
    %v838 = vunpack.c.l.b16 %v644
    %v839 = vunpack.c.h.b16 %v644
    %v840 = vunpack.c.l.b16 %v645
    %v841 = vunpack.c.l.b16 %v646
    %v842 = vunpack.c.h.b16 %v646
    %v843 = vunpack.c.l.b16 %v647
    %v844 = vunpack.c.h.b16 %v647
    %v845 = vunpack.c.l.b16 %v648
    %v846 = vunpack.c.h.b16 %v648
    %v847 = vunpack.c.l.b16 %v649
    %v848 = vunpack.c.l.b16 %v650
    %v849 = vunpack.c.h.b16 %v650
    %v850 = vunpack.c.l.b16 %v651
    %v851 = vunpack.c.h.b16 %v651
    %v852 = vunpack.c.l.b16 %v652
    %v853 = vunpack.c.h.b16 %v652
    %v854 = vunpack.c.l.b16 %v653
    %v855 = vunpack.c.l.b16 %v654
    %v856 = vunpack.c.h.b16 %v654
    %v857 = vunpack.c.l.b16 %v655
    %v858 = vunpack.c.h.b16 %v655
    %v859 = vunpack.c.l.b16 %v656
    %v860 = vunpack.c.h.b16 %v656
    %v861 = vunpack.c.l.b16 %v657
    %v862 = vunpack.c.l.b16 %v658
    %v863 = vunpack.c.h.b16 %v658
    %v864 = vunpack.c.l.b16 %v659
    %v865 = vunpack.c.h.b16 %v659
    %v866 = vunpack.c.l.b16 %v660
    %v867 = vunpack.c.h.b16 %v660
    %v868 = vunpack.c.l.b16 %v661
    %v869 = vunpack.c.l.b16 %v662
    %v870 = vunpack.c.h.b16 %v662
    %v871 = vunpack.c.l.b16 %v663
    %v872 = vunpack.c.h.b16 %v663
    %v873 = vunpack.c.l.b16 %v664
    %v874 = vunpack.c.h.b16 %v664
    %v875 = vunpack.c.l.b16 %v665
    %v876 = vunpack.c.l.b16 %v666
    %v877 = vunpack.c.h.b16 %v666
    %v878 = vunpack.c.l.b16 %v667
    %v879 = vunpack.c.h.b16 %v667
    %v880 = vunpack.c.l.b16 %v668
    %v881 = vunpack.c.h.b16 %v668
    %v882 = vunpack.c.l.b16 %v669
    %v883 = vpack.c.b16 %v778, %v771
    %v884 = vpack.c.b16 %v779, %v772
    %v885 = vpack.c.b16 %v780, %v773
    %v886 = vpack.c.b16 %v781, %v774
    %v887 = vpack.c.b16 %v782, %v775
    %v888 = vpack.c.b16 %v783, %v776
    %v889 = vpack.c.b16 %v784, %v777
    %v890 = vpack.c.b16 %v792, %v785
    %v891 = vpack.c.b16 %v793, %v786
    %v892 = vpack.c.b16 %v794, %v787
    %v893 = vpack.c.b16 %v795, %v788
    %v894 = vpack.c.b16 %v796, %v789
    %v895 = vpack.c.b16 %v797, %v790
    %v896 = vpack.c.b16 %v798, %v791
    %v897 = vpack.c.b16 %v806, %v799
    %v898 = vpack.c.b16 %v807, %v800
    %v899 = vpack.c.b16 %v808, %v801
    %v900 = vpack.c.b16 %v809, %v802
    %v901 = vpack.c.b16 %v810, %v803
    %v902 = vpack.c.b16 %v811, %v804
    %v903 = vpack.c.b16 %v812, %v805
    %v904 = vpack.c.b16 %v820, %v813
    %v905 = vpack.c.b16 %v821, %v814
    %v906 = vpack.c.b16 %v822, %v815
    %v907 = vpack.c.b16 %v823, %v816
    %v908 = vpack.c.b16 %v824, %v817
    %v909 = vpack.c.b16 %v825, %v818
    %v910 = vpack.c.b16 %v826, %v819
    %v911 = vpack.c.b16 %v834, %v827
    %v912 = vpack.c.b16 %v835, %v828
    %v913 = vpack.c.b16 %v836, %v829
    %v914 = vpack.c.b16 %v837, %v830
    %v915 = vpack.c.b16 %v838, %v831
    %v916 = vpack.c.b16 %v839, %v832
    %v917 = vpack.c.b16 %v840, %v833
    %v918 = vpack.c.b16 %v848, %v841
    %v919 = vpack.c.b16 %v849, %v842
    %v920 = vpack.c.b16 %v850, %v843
    %v921 = vpack.c.b16 %v851, %v844
    %v922 = vpack.c.b16 %v852, %v845
    %v923 = vpack.c.b16 %v853, %v846
    %v924 = vpack.c.b16 %v854, %v847
    %v925 = vpack.c.b16 %v862, %v855
    %v926 = vpack.c.b16 %v863, %v856
    %v927 = vpack.c.b16 %v864, %v857
    %v928 = vpack.c.b16 %v865, %v858
    %v929 = vpack.c.b16 %v866, %v859
    %v930 = vpack.c.b16 %v867, %v860
    %v931 = vpack.c.b16 %v868, %v861
    %v932 = vpack.c.b16 %v876, %v869
    %v933 = vpack.c.b16 %v877, %v870
    %v934 = vpack.c.b16 %v878, %v871
    %v935 = vpack.c.b16 %v879, %v872
    %v936 = vpack.c.b16 %v880, %v873
    %v937 = vpack.c.b16 %v881, %v874
    %v938 = vpack.c.b16 %v882, %v875
    %995 = vmatprep.subr.bf16.mxu0 %v933
    %996 = vmatpush1.bf16.msra.mxu0 %v932
    %997 = vmatprep.subr.bf16.mxu0 %v926
    %998 = vmatpush1.bf16.msra.mxu0 %v925
    %999 = vmatprep.subr.bf16.mxu0 %v919
    %1000 = vmatpush1.bf16.msra.mxu0 %v918
    %1001 = vmatprep.subr.bf16.mxu0 %v912
    %1002 = vmatpush1.bf16.msra.mxu0 %v911
    %1003 = vmatprep.subr.bf16.mxu0 %v905
    %1004 = vmatpush1.bf16.msra.mxu0 %v904
    %1005 = vmatprep.subr.bf16.mxu0 %v898
    %1006 = vmatpush1.bf16.msra.mxu0 %v897
    %1007 = vmatprep.subr.bf16.mxu0 %v891
    %1008 = vmatpush1.bf16.msra.mxu0 %v890
    %1009 = vmatprep.subr.bf16.mxu0 %v884
    %1010 = vmatpush1.bf16.msra.mxu0 %v883
    %1011 = vmatprep.subr.bf16.mxu0 0
    %1012 = vmatpush2.bf16.msra.mxu0 0
    %1013 = vmatprep.subr.bf16.mxu0 0
    %1014 = vmatpush2.bf16.msra.mxu0 0
    %1015 = vmatprep.subr.bf16.mxu0 0
    %1016 = vmatpush2.bf16.msra.mxu0 0
    %1017 = vmatprep.subr.bf16.mxu0 0
    %1018 = vmatpush2.bf16.msra.mxu0 0
    %1019 = vmatprep.subr.bf16.mxu0 0
    %1020 = vmatpush2.bf16.msra.mxu0 0
    %1021 = vmatprep.subr.bf16.mxu0 0
    %1022 = vmatpush2.bf16.msra.mxu0 0
    %1023 = vmatprep.subr.bf16.mxu0 0
    %1024 = vmatpush2.bf16.msra.mxu0 0
    %1025 = vmatprep.subr.bf16.mxu0 0
    %1026 = vmatpush2.bf16.msra.mxu0 0
    %1027 = vmatprep.mubr.bf16.mxu0 0
    %1028 = vmatmul.mubr.bf16.gmra.mxu0 %v605
    %v1029 = vpop.f32.mrf.mxu0
    %v1030 = vadd.f32 %v675, %v1029
    %v1031 = vpop.f32.mrf.mxu0
    %v1032 = vadd.f32 %v679, %v1031
    %v1033 = vpop.f32.mrf.mxu0
    %v1034 = vpop.f32.mrf.mxu0
    %1035 = vdwg.mxu0
    %1036 = vmatprep.subr.bf16.mxu0 %v935
    %1037 = vmatpush1.bf16.msra.mxu0 %v934
    %1038 = vmatprep.subr.bf16.mxu0 %v928
    %1039 = vmatpush1.bf16.msra.mxu0 %v927
    %1040 = vmatprep.subr.bf16.mxu0 %v921
    %1041 = vmatpush1.bf16.msra.mxu0 %v920
    %1042 = vmatprep.subr.bf16.mxu0 %v914
    %1043 = vmatpush1.bf16.msra.mxu0 %v913
    %1044 = vmatprep.subr.bf16.mxu0 %v907
    %1045 = vmatpush1.bf16.msra.mxu0 %v906
    %1046 = vmatprep.subr.bf16.mxu0 %v900
    %1047 = vmatpush1.bf16.msra.mxu0 %v899
    %1048 = vmatprep.subr.bf16.mxu0 %v893
    %1049 = vmatpush1.bf16.msra.mxu0 %v892
    %1050 = vmatprep.subr.bf16.mxu0 %v886
    %1051 = vmatpush1.bf16.msra.mxu0 %v885
    %1052 = vmatprep.subr.bf16.mxu0 0
    %1053 = vmatpush2.bf16.msra.mxu0 0
    %1054 = vmatprep.subr.bf16.mxu0 0
    %1055 = vmatpush2.bf16.msra.mxu0 0
    %1056 = vmatprep.subr.bf16.mxu0 0
    %1057 = vmatpush2.bf16.msra.mxu0 0
    %1058 = vmatprep.subr.bf16.mxu0 0
    %1059 = vmatpush2.bf16.msra.mxu0 0
    %1060 = vmatprep.subr.bf16.mxu0 0
    %1061 = vmatpush2.bf16.msra.mxu0 0
    %1062 = vmatprep.subr.bf16.mxu0 0
    %1063 = vmatpush2.bf16.msra.mxu0 0
    %1064 = vmatprep.subr.bf16.mxu0 0
    %1065 = vmatpush2.bf16.msra.mxu0 0
    %1066 = vmatprep.subr.bf16.mxu0 0
    %1067 = vmatpush2.bf16.msra.mxu0 0
    %1068 = vmatprep.mubr.bf16.mxu0 0
    %1069 = vmatmul.mubr.bf16.gmra.mxu0 %v605
    %v1070 = vpop.f32.mrf.mxu0
    %v1071 = vadd.f32 %v683, %v1070
    %v1072 = vpop.f32.mrf.mxu0
    %v1073 = vadd.f32 %v687, %v1072
    %v1074 = vpop.f32.mrf.mxu0
    %v1075 = vpop.f32.mrf.mxu0
    %1076 = vdwg.mxu0
    %1077 = vmatprep.subr.bf16.mxu0 %v937
    %1078 = vmatpush1.bf16.msra.mxu0 %v936
    %1079 = vmatprep.subr.bf16.mxu0 %v930
    %1080 = vmatpush1.bf16.msra.mxu0 %v929
    %1081 = vmatprep.subr.bf16.mxu0 %v923
    %1082 = vmatpush1.bf16.msra.mxu0 %v922
    %1083 = vmatprep.subr.bf16.mxu0 %v916
    %1084 = vmatpush1.bf16.msra.mxu0 %v915
    %1085 = vmatprep.subr.bf16.mxu0 %v909
    %1086 = vmatpush1.bf16.msra.mxu0 %v908
    %1087 = vmatprep.subr.bf16.mxu0 %v902
    %1088 = vmatpush1.bf16.msra.mxu0 %v901
    %1089 = vmatprep.subr.bf16.mxu0 %v895
    %1090 = vmatpush1.bf16.msra.mxu0 %v894
    %1091 = vmatprep.subr.bf16.mxu0 %v888
    %1092 = vmatpush1.bf16.msra.mxu0 %v887
    %1093 = vmatprep.subr.bf16.mxu0 0
    %1094 = vmatpush2.bf16.msra.mxu0 0
    %1095 = vmatprep.subr.bf16.mxu0 0
    %1096 = vmatpush2.bf16.msra.mxu0 0
    %1097 = vmatprep.subr.bf16.mxu0 0
    %1098 = vmatpush2.bf16.msra.mxu0 0
    %1099 = vmatprep.subr.bf16.mxu0 0
    %1100 = vmatpush2.bf16.msra.mxu0 0
    %1101 = vmatprep.subr.bf16.mxu0 0
    %1102 = vmatpush2.bf16.msra.mxu0 0
    %1103 = vmatprep.subr.bf16.mxu0 0
    %1104 = vmatpush2.bf16.msra.mxu0 0
    %1105 = vmatprep.subr.bf16.mxu0 0
    %1106 = vmatpush2.bf16.msra.mxu0 0
    %1107 = vmatprep.subr.bf16.mxu0 0
    %1108 = vmatpush2.bf16.msra.mxu0 0
    %1109 = vmatprep.mubr.bf16.mxu0 0
    %1110 = vmatmul.mubr.bf16.gmra.mxu0 %v605
    %v1111 = vpop.f32.mrf.mxu0
    %v1112 = vadd.f32 %v691, %v1111
    %v1113 = vpop.f32.mrf.mxu0
    %v1114 = vadd.f32 %v695, %v1113
    %v1115 = vpop.f32.mrf.mxu0
    %v1116 = vpop.f32.mrf.mxu0
    %1117 = vdwg.mxu0
    %1118 = vmatprep.subr.bf16.mxu0 0
    %1119 = vmatpush1.bf16.msra.mxu0 %v938
    %1120 = vmatprep.subr.bf16.mxu0 0
    %1121 = vmatpush1.bf16.msra.mxu0 %v931
    %1122 = vmatprep.subr.bf16.mxu0 0
    %1123 = vmatpush1.bf16.msra.mxu0 %v924
    %1124 = vmatprep.subr.bf16.mxu0 0
    %1125 = vmatpush1.bf16.msra.mxu0 %v917
    %1126 = vmatprep.subr.bf16.mxu0 0
    %1127 = vmatpush1.bf16.msra.mxu0 %v910
    %1128 = vmatprep.subr.bf16.mxu0 0
    %1129 = vmatpush1.bf16.msra.mxu0 %v903
    %1130 = vmatprep.subr.bf16.mxu0 0
    %1131 = vmatpush1.bf16.msra.mxu0 %v896
    %1132 = vmatprep.subr.bf16.mxu0 0
    %1133 = vmatpush1.bf16.msra.mxu0 %v889
    %1134 = vmatprep.subr.bf16.mxu0 0
    %1135 = vmatpush2.bf16.msra.mxu0 0
    %1136 = vmatprep.subr.bf16.mxu0 0
    %1137 = vmatpush2.bf16.msra.mxu0 0
    %1138 = vmatprep.subr.bf16.mxu0 0
    %1139 = vmatpush2.bf16.msra.mxu0 0
    %1140 = vmatprep.subr.bf16.mxu0 0
    %1141 = vmatpush2.bf16.msra.mxu0 0
    %1142 = vmatprep.subr.bf16.mxu0 0
    %1143 = vmatpush2.bf16.msra.mxu0 0
    %1144 = vmatprep.subr.bf16.mxu0 0
    %1145 = vmatpush2.bf16.msra.mxu0 0
    %1146 = vmatprep.subr.bf16.mxu0 0
    %1147 = vmatpush2.bf16.msra.mxu0 0
    %1148 = vmatprep.subr.bf16.mxu0 0
    %1149 = vmatpush2.bf16.msra.mxu0 0
    %1150 = vmatprep.mubr.bf16.mxu0 0
    %1151 = vmatmul.mubr.bf16.gmra.mxu0 %v605
    %v1152 = vpop.f32.mrf.mxu0
    %v1153 = vadd.f32 %v699, %v1152
    %v1154 = vpop.f32.mrf.mxu0
    %v1155 = vpop.f32.mrf.mxu0
    %v1156 = vpop.f32.mrf.mxu0
    %1157 = vdwg.mxu0
    %1158 = vst [vmem:[#allocation2] sm:$0xff] %v1030
    %1159 = vst [vmem:[#allocation2 + $0x8] sm:$0xff] %v1032
    %1160 = vst [vmem:[#allocation2 + $0x10] sm:$0xff] %v1071
    %1161 = vst [vmem:[#allocation2 + $0x18] sm:$0xff] %v1073
    %1162 = vst [vmem:[#allocation2 + $0x20] sm:$0xff] %v1112
    %1163 = vst [vmem:[#allocation2 + $0x28] sm:$0xff] %v1114
    %1164 = vst.msk [vmem:[#allocation2 + $0x30] sm:$0xff] %vm435, %v1153
    // Predicated region
    $region22: #{autoenc_forward.1} parent=1 // pred_check
      _
    $region23: #{autoenc_forward.1} parent=1 // pred_check_branch
      %1166 = sbr.rel (0) target = $region25
    $region24: #{autoenc_forward.1} parent=1 // pred_region
      %s1168 = ssub.s32 896, 896
      %1169 = vsyncadd [#allocation3], %s1168
      %s1171 = sshll.u32 [#allocation2], 4
      %s1172 = int_to_ptr.vmem [resolvable:$true] %s1171
      %1174 = dma.vmem_to_hbm [thread:$0]  %s1172, 896, %s5, [#allocation3]
    $region25: #{autoenc_forward.1} parent=1 // pred_fallthru
      _
    // Predicated region
    $region26: #{autoenc_forward.1} parent=1 // pred_check
      _
    $region27: #{autoenc_forward.1} parent=1 // pred_check_branch
      %1176 = sbr.rel (0) target = $region29
    $region28: #{autoenc_forward.1} parent=1 // pred_region
      %1177 = dma.done [#allocation3], 896
    $region29: #{autoenc_forward.1} parent=1 // pred_fallthru
      _
    %1178 = vsyncpa [#allocation3], 1

</llo_original>
